<compile_context>
chip_gen: v7x
topology: tpu7x:2x2x1
jax: 0.10.0
libtpu: 0.0.40
codegen_flags: <defaults>
</compile_context>

<pallas_src>
import math

import jax
import jax.numpy as jnp
from jax import lax
from jax.experimental import pallas as pl
from jax.experimental.pallas import tpu as pltpu


def _stable_softplus(x):
    # log(1 + exp(x)) without overflow for large x (exact for all x).
    return jnp.maximum(x, 0.0) + jnp.log1p(jnp.exp(-jnp.abs(x)))


def _pick_tile(dim: int, max_tile: int) -> int:
    """Largest multiple-of-128 divisor of `dim` that is <= max_tile; else full dim.

    Keeps block last-dims lane-dense (multiple of 128) or full-extent, which is
    what the (8,128) block rule requires.
    """
    if dim % 128 != 0:
        return dim
    t = max(128, (min(max_tile, dim) // 128) * 128)
    while t >= 128:
        if dim % t == 0:
            return t
        t -= 128
    return dim


# Budget for the three double-buffered f32 weight streams (+ x / y residents).
# Fits comfortably inside the 32 MiB default scoped VMEM on v6e/v7x and leaves
# headroom on v7x's 64 MiB physical VMEM per TensorCore.
_WEIGHT_STREAM_BUDGET = 24 * 1024 * 1024


def _choose_tiles(batch: int, in_features: int, out_features: int):
    # K tile: bound the contraction extent of each weight block.
    tile_k = _pick_tile(in_features, 2048)
    # Out tile: bound so (3 weight streams x 2 buffers + y column) fits the budget.
    bytes_per_out_row = 3 * 2 * tile_k * 4 + batch * 4
    max_out = max(128, _WEIGHT_STREAM_BUDGET // bytes_per_out_row)
    tile_out = _pick_tile(out_features, min(max_out, 1024))
    return tile_out, tile_k


def _make_bnn_kernel(prior_std: float, tile_out: int, tile_k: int):
    half_log_2pi = 0.5 * math.log(2.0 * math.pi)
    log_prior_std = math.log(prior_std)
    inv_prior_var_half = 0.5 / (prior_std * prior_std)
    # Per-step constants folded onto the reduced scalars (never broadcast per-element).
    nw = tile_out * tile_k            # weight params handled per (j, k) step
    nb = tile_out                     # bias params handled once per j (at k == 0)
    w_prior_c = nw * (-half_log_2pi - log_prior_std)
    w_post_c = nw * (-half_log_2pi)
    b_prior_c = nb * (-half_log_2pi - log_prior_std)
    b_post_c = nb * (-half_log_2pi)

    def kernel(x_ref, w_mu_ref, w_rho_ref, w_eps_ref,
               b_mu_ref, b_rho_ref, b_eps_ref,
               y_ref, log_prior_ref, log_post_ref):
        k = pl.program_id(1)

        # --- reparameterization sample for this (out-tile, K-tile) weight block ---
        w_eps = w_eps_ref[...]
        sigma_w = _stable_softplus(w_rho_ref[...])
        w = w_mu_ref[...] + sigma_w * w_eps

        # --- weight-tile log-prob partials (reduce first, constants folded in) ---
        sum_sq = jnp.sum(w * w, keepdims=True)
        sum_log_sigma = jnp.sum(jnp.log(sigma_w), keepdims=True)
        # (w - mu) / sigma == eps exactly: posterior quadratic term is eps^2.
        sum_eps_sq = jnp.sum(w_eps * w_eps, keepdims=True)
        lp = w_prior_c - inv_prior_var_half * sum_sq           # (1, 1)
        lq = w_post_c - sum_log_sigma - 0.5 * sum_eps_sq       # (1, 1)

        # --- first K step for this out-tile: bias sample, y init, partial init ---
        @pl.when(k == 0)
        def _():
            b_eps = b_eps_ref[...]
            sigma_b = _stable_softplus(b_rho_ref[...])
            b = b_mu_ref[...] + sigma_b * b_eps                # (1, tile_out)
            y_ref[...] = jnp.broadcast_to(b, y_ref.shape).astype(y_ref.dtype)

            b_sum_sq = jnp.sum(b * b, keepdims=True)
            b_sum_log_sigma = jnp.sum(jnp.log(sigma_b), keepdims=True)
            b_sum_eps_sq = jnp.sum(b_eps * b_eps, keepdims=True)
            blp = b_prior_c - inv_prior_var_half * b_sum_sq
            blq = b_post_c - b_sum_log_sigma - 0.5 * b_sum_eps_sq
            log_prior_ref[...] = jnp.broadcast_to(blp, log_prior_ref.shape)
            log_post_ref[...] = jnp.broadcast_to(blq, log_post_ref.shape)

        # --- F.linear partial: y += x_k @ w_k.T, contracted without forming w.T ---
        y_ref[...] += lax.dot_general(
            x_ref[...], w,
            dimension_numbers=(((1,), (1,)), ((), ())),
            preferred_element_type=jnp.float32)

        # Accumulate this out-tile's partial across K steps (resident block).
        log_prior_ref[...] += lp
        log_post_ref[...] += lq

    return kernel


def linear_bnn_forward(x, w_mu, w_rho, b_mu, b_rho, w_eps, b_eps,
                       prior_var: float = 1.0,
                       tile_out: int | None = None, tile_k: int | None = None):
    """Pallas implementation of Linear_BNN.forward.

    Returns (y, log_prior, log_post); y matches torch F.linear(input, w, b).
    `prior_var` is used as the Normal *scale* (std), mirroring the PyTorch
    module's torch.distributions.Normal(0, prior_var) — intentional quirk.
    """
    batch, in_features = x.shape
    out_features = w_mu.shape[0]

    auto_to, auto_tk = _choose_tiles(batch, in_features, out_features)
    tile_out = auto_to if tile_out is None else tile_out
    tile_k = auto_tk if tile_k is None else tile_k
    assert out_features % tile_out == 0 and in_features % tile_k == 0

    num_j = out_features // tile_out
    num_k = in_features // tile_k

    # bias params as (1, out_features) 2-D arrays for TPU-friendly layout.
    b_mu2 = b_mu.reshape(1, out_features)
    b_rho2 = b_rho.reshape(1, out_features)
    b_eps2 = b_eps.reshape(1, out_features)

    # Explicit VMEM limit from the estimated working set (double-buffered streams
    # + resident x / y / scalar blocks), clamped to v7x's 64 MiB physical VMEM.
    est = (3 * 2 * tile_out * tile_k * 4      # w_mu / w_rho / w_eps streams
           + 2 * batch * tile_k * 4           # x stream
           + 3 * 2 * tile_out * 4             # bias streams
           + 2 * batch * tile_out * 4         # y block
           + 2 * 2 * 8 * 128 * 4)             # scalar partial blocks
    vmem_limit = int(min(max(2 * est + (8 << 20), 32 << 20), 64 << 20))

    kernel = _make_bnn_kernel(float(prior_var), tile_out, tile_k)

    x_spec = pl.BlockSpec((batch, tile_k), lambda j, k: (0, k))
    w_spec = pl.BlockSpec((tile_out, tile_k), lambda j, k: (j, k))
    b_spec = pl.BlockSpec((1, tile_out), lambda j, k: (0, j))
    y_spec = pl.BlockSpec((batch, tile_out), lambda j, k: (0, j))
    # Per-out-tile scalar partials: one (8,128) tile per j (disjoint -> j can be
    # "parallel"); every element of tile j holds the same partial value.
    s_spec = pl.BlockSpec((8, 128), lambda j, k: (j, 0))

    y, lp_slab, lq_slab = pl.pallas_call(
        kernel,
        grid=(num_j, num_k),
        out_shape=(
            jax.ShapeDtypeStruct((batch, out_features), jnp.float32),
            jax.ShapeDtypeStruct((num_j * 8, 128), jnp.float32),
            jax.ShapeDtypeStruct((num_j * 8, 128), jnp.float32),
        ),
        in_specs=[x_spec, w_spec, w_spec, w_spec, b_spec, b_spec, b_spec],
        out_specs=(y_spec, s_spec, s_spec),
        compiler_params=pltpu.CompilerParams(
            # out-feature tiles are independent -> "parallel" (megacore-shardable
            # on v7x); the K axis accumulates into y / scalar partials -> "arbitrary".
            dimension_semantics=("parallel", "arbitrary"),
            vmem_limit_bytes=vmem_limit),
    )(x, w_mu, w_rho, w_eps, b_mu2, b_rho2, b_eps2)

    # One representative element per out-tile partial; final (tiny) reduce in XLA.
    log_prior = jnp.sum(lp_slab[::8, 0])
    log_post = jnp.sum(lq_slab[::8, 0])
    return y, log_prior, log_post


def _reference_forward(x, w_mu, w_rho, b_mu, b_rho, w_eps, b_eps, prior_var=1.0):
    """Pure-JAX reference mirroring the PyTorch module semantics."""
    sigma_w = _stable_softplus(w_rho)
    sigma_b = _stable_softplus(b_rho)
    w = w_mu + sigma_w * w_eps
    b = b_mu + sigma_b * b_eps

    def normal_logprob(v, loc, scale):
        return (-0.5 * jnp.log(2.0 * jnp.pi) - jnp.log(scale)
                - 0.5 * ((v - loc) / scale) ** 2)

    log_prior = (jnp.sum(normal_logprob(w, 0.0, prior_var))
                 + jnp.sum(normal_logprob(b, 0.0, prior_var)))
    log_post = (jnp.sum(normal_logprob(w, w_mu, sigma_w))
                + jnp.sum(normal_logprob(b, b_mu, sigma_b)))
    y = x @ w.T + b
    return y, log_prior, log_post


def _run_case(key, batch, in_features, out_features, prior_var=1.0,
              tile_out=None, tile_k=None):
    k_x, k_weps, k_beps, k_mu, k_rho = jax.random.split(key, 5)

    # Parameters: zeros matches Linear_BNN.__init__; add a tiny jitter on mu/rho
    # so the test also exercises nonzero mu / sigma paths.
    w_mu = 0.05 * jax.random.normal(k_mu, (out_features, in_features), jnp.float32)
    w_rho = 0.1 * jax.random.normal(k_rho, (out_features, in_features), jnp.float32)
    b_mu = jnp.zeros((out_features,), jnp.float32)
    b_rho = jnp.zeros((out_features,), jnp.float32)

    # Deterministic stand-ins for the Normal(0,1) samples drawn in forward().
    x = jax.random.normal(k_x, (batch, in_features), jnp.float32)
    w_eps = jax.random.normal(k_weps, (out_features, in_features), jnp.float32)
    b_eps = jax.random.normal(k_beps, (out_features,), jnp.float32)

    y, log_prior, log_post = linear_bnn_forward(
        x, w_mu, w_rho, b_mu, b_rho, w_eps, b_eps, prior_var=prior_var,
        tile_out=tile_out, tile_k=tile_k)
    jax.block_until_ready((y, log_prior, log_post))

    y_ref, lp_ref, lq_ref = _reference_forward(
        x, w_mu, w_rho, b_mu, b_rho, w_eps, b_eps, prior_var=prior_var)

    assert jnp.allclose(y, y_ref, rtol=1e-5, atol=1e-4), "y mismatch"
    assert jnp.allclose(log_prior, lp_ref, rtol=1e-5, atol=1e-3), "log_prior mismatch"
    assert jnp.allclose(log_post, lq_ref, rtol=1e-5, atol=1e-3), "log_post mismatch"


if __name__ == "__main__":
    key = jax.random.PRNGKey(0)
    k1, k2, k3 = jax.random.split(key, 3)

    # Small module-like shapes (single grid step, full-extent blocks).
    _run_case(k1, batch=8, in_features=32, out_features=16, prior_var=1.0)

    # Lane-dense case: auto tiling picks a single big (512-wide) out tile.
    _run_case(k2, batch=8, in_features=128, out_features=512, prior_var=1.0)

    # Forced multi-tile grid: 3 parallel out-feature tiles x 2 K steps; exercises
    # the y / scalar-partial K accumulation and bias handling at k == 0.
    _run_case(k3, batch=8, in_features=256, out_features=384, prior_var=1.0,
              tile_out=128, tile_k=128)

    print("KERNEL_OK")
</pallas_src>

<mosaic_0001>
module attributes {stable_mosaic.version = 11 : i64} {
  func.func @kernel(%arg0: i32, %arg1: i32, %arg2: memref<8x32xf32, #tpu.memory_space<vmem>>, %arg3: memref<16x32xf32, #tpu.memory_space<vmem>>, %arg4: memref<16x32xf32, #tpu.memory_space<vmem>>, %arg5: memref<16x32xf32, #tpu.memory_space<vmem>>, %arg6: memref<1x16xf32, #tpu.memory_space<vmem>>, %arg7: memref<1x16xf32, #tpu.memory_space<vmem>>, %arg8: memref<1x16xf32, #tpu.memory_space<vmem>>, %arg9: memref<8x16xf32, #tpu.memory_space<vmem>>, %arg10: memref<8x128xf32, #tpu.memory_space<vmem>>, %arg11: memref<8x128xf32, #tpu.memory_space<vmem>>) attributes {dimension_semantics = [#tpu.dimension_semantics<parallel>, #tpu.dimension_semantics<arbitrary>], iteration_bounds = array<i64: 1, 1>, scalar_prefetch = 0 : i64, scratch_operands = 0 : i64, tpu.core_type = #tpu.core_type<tc>, window_params = [{transform_indices = @transform_0, window_bounds = array<i64: 8, 32>}, {transform_indices = @transform_1, window_bounds = array<i64: 16, 32>}, {transform_indices = @transform_2, window_bounds = array<i64: 16, 32>}, {transform_indices = @transform_3, window_bounds = array<i64: 16, 32>}, {transform_indices = @transform_4, window_bounds = array<i64: 1, 16>}, {transform_indices = @transform_5, window_bounds = array<i64: 1, 16>}, {transform_indices = @transform_6, window_bounds = array<i64: 1, 16>}, {transform_indices = @transform_7, window_bounds = array<i64: 8, 16>}, {transform_indices = @transform_8, window_bounds = array<i64: 8, 128>}, {transform_indices = @transform_9, window_bounds = array<i64: 8, 128>}]} {
    %c0 = arith.constant 0 : index
    %c0_0 = arith.constant 0 : index
    %0 = vector.load %arg5[%c0, %c0_0] : memref<16x32xf32, #tpu.memory_space<vmem>>, vector<16x32xf32>
    %c0_1 = arith.constant 0 : index
    %c0_2 = arith.constant 0 : index
    %1 = vector.load %arg4[%c0_1, %c0_2] : memref<16x32xf32, #tpu.memory_space<vmem>>, vector<16x32xf32>
    %cst = arith.constant 0.000000e+00 : f32
    %2 = vector.broadcast %cst : f32 to vector<16x32xf32>
    %3 = arith.maximumf %1, %2 : vector<16x32xf32>
    %4 = math.absf %1 : vector<16x32xf32>
    %cst_3 = arith.constant 0.000000e+00 : f32
    %5 = vector.broadcast %cst_3 : f32 to vector<16x32xf32>
    %6 = arith.subf %5, %4 : vector<16x32xf32>
    %7 = math.exp %6 : vector<16x32xf32>
    %8 = math.log1p %7 : vector<16x32xf32>
    %9 = arith.addf %3, %8 : vector<16x32xf32>
    %c0_4 = arith.constant 0 : index
    %c0_5 = arith.constant 0 : index
    %10 = vector.load %arg3[%c0_4, %c0_5] : memref<16x32xf32, #tpu.memory_space<vmem>>, vector<16x32xf32>
    %11 = arith.mulf %9, %0 : vector<16x32xf32>
    %12 = arith.addf %10, %11 : vector<16x32xf32>
    %13 = arith.mulf %12, %12 : vector<16x32xf32>
    %14 = vector.shape_cast %13 : vector<16x32xf32> to vector<1x16x32xf32>
    %cst_6 = arith.constant dense<0.000000e+00> : vector<1xf32>
    %15 = vector.multi_reduction <add>, %14, %cst_6 [1, 2] : vector<1x16x32xf32> to vector<1xf32>
    %16 = vector.shape_cast %15 : vector<1xf32> to vector<1x1x1xf32>
    %17 = vector.extract %16[0, 0, 0] : f32 from vector<1x1x1xf32>
    %18 = vector.broadcast %17 : f32 to vector<1x1xf32>
    %19 = math.log %9 : vector<16x32xf32>
    %20 = vector.shape_cast %19 : vector<16x32xf32> to vector<1x16x32xf32>
    %cst_7 = arith.constant dense<0.000000e+00> : vector<1xf32>
    %21 = vector.multi_reduction <add>, %20, %cst_7 [1, 2] : vector<1x16x32xf32> to vector<1xf32>
    %22 = vector.shape_cast %21 : vector<1xf32> to vector<1x1x1xf32>
    %23 = vector.extract %22[0, 0, 0] : f32 from vector<1x1x1xf32>
    %24 = vector.broadcast %23 : f32 to vector<1x1xf32>
    %25 = arith.mulf %0, %0 : vector<16x32xf32>
    %26 = vector.shape_cast %25 : vector<16x32xf32> to vector<1x16x32xf32>
    %cst_8 = arith.constant dense<0.000000e+00> : vector<1xf32>
    %27 = vector.multi_reduction <add>, %26, %cst_8 [1, 2] : vector<1x16x32xf32> to vector<1xf32>
    %28 = vector.shape_cast %27 : vector<1xf32> to vector<1x1x1xf32>
    %29 = vector.extract %28[0, 0, 0] : f32 from vector<1x1x1xf32>
    %30 = vector.broadcast %29 : f32 to vector<1x1xf32>
    %cst_9 = arith.constant 5.000000e-01 : f32
    %31 = vector.broadcast %cst_9 : f32 to vector<1x1xf32>
    %32 = arith.mulf %31, %18 : vector<1x1xf32>
    %cst_10 = arith.constant -470.496521 : f32
    %33 = vector.broadcast %cst_10 : f32 to vector<1x1xf32>
    %34 = arith.subf %33, %32 : vector<1x1xf32>
    %cst_11 = arith.constant -470.496521 : f32
    %35 = vector.broadcast %cst_11 : f32 to vector<1x1xf32>
    %36 = arith.subf %35, %24 : vector<1x1xf32>
    %cst_12 = arith.constant 5.000000e-01 : f32
    %37 = vector.broadcast %cst_12 : f32 to vector<1x1xf32>
    %38 = arith.mulf %37, %30 : vector<1x1xf32>
    %39 = arith.subf %36, %38 : vector<1x1xf32>
    %c0_i32 = arith.constant 0 : i32
    %40 = arith.cmpi eq, %arg1, %c0_i32 : i32
    %41 = arith.extui %40 : i1 to i32
    %c0_i32_13 = arith.constant 0 : i32
    %42 = arith.cmpi ne, %41, %c0_i32_13 : i32
    scf.if %42 {
      %c0_29 = arith.constant 0 : index
      %c0_30 = arith.constant 0 : index
      %56 = vector.load %arg8[%c0_29, %c0_30] : memref<1x16xf32, #tpu.memory_space<vmem>>, vector<1x16xf32>
      %c0_31 = arith.constant 0 : index
      %c0_32 = arith.constant 0 : index
      %57 = vector.load %arg7[%c0_31, %c0_32] : memref<1x16xf32, #tpu.memory_space<vmem>>, vector<1x16xf32>
      %cst_33 = arith.constant 0.000000e+00 : f32
      %58 = vector.broadcast %cst_33 : f32 to vector<1x16xf32>
      %59 = arith.maximumf %57, %58 : vector<1x16xf32>
      %60 = math.absf %57 : vector<1x16xf32>
      %cst_34 = arith.constant 0.000000e+00 : f32
      %61 = vector.broadcast %cst_34 : f32 to vector<1x16xf32>
      %62 = arith.subf %61, %60 : vector<1x16xf32>
      %63 = math.exp %62 : vector<1x16xf32>
      %64 = math.log1p %63 : vector<1x16xf32>
      %65 = arith.addf %59, %64 : vector<1x16xf32>
      %c0_35 = arith.constant 0 : index
      %c0_36 = arith.constant 0 : index
      %66 = vector.load %arg6[%c0_35, %c0_36] : memref<1x16xf32, #tpu.memory_space<vmem>>, vector<1x16xf32>
      %67 = arith.mulf %65, %56 : vector<1x16xf32>
      %68 = arith.addf %66, %67 : vector<1x16xf32>
      %69 = vector.shape_cast %68 : vector<1x16xf32> to vector<1x16xf32>
      %70 = vector.broadcast %69 : vector<1x16xf32> to vector<8x16xf32>
      %c0_37 = arith.constant 0 : index
      %c0_38 = arith.constant 0 : index
      %71 = vector.load %arg9[%c0_37, %c0_38] : memref<8x16xf32, #tpu.memory_space<vmem>>, vector<8x16xf32>
      tpu.vector_store %arg9[%c0_37, %c0_38], %70 {strides = array<i32>} : memref<8x16xf32, #tpu.memory_space<vmem>>, vector<8x16xf32>,
      %72 = arith.mulf %68, %68 : vector<1x16xf32>
      %73 = vector.shape_cast %72 : vector<1x16xf32> to vector<1x1x16xf32>
      %cst_39 = arith.constant dense<0.000000e+00> : vector<1xf32>
      %74 = vector.multi_reduction <add>, %73, %cst_39 [1, 2] : vector<1x1x16xf32> to vector<1xf32>
      %75 = vector.shape_cast %74 : vector<1xf32> to vector<1x1x1xf32>
      %76 = vector.extract %75[0, 0, 0] : f32 from vector<1x1x1xf32>
      %77 = vector.broadcast %76 : f32 to vector<1x1xf32>
      %78 = math.log %65 : vector<1x16xf32>
      %79 = vector.shape_cast %78 : vector<1x16xf32> to vector<1x1x16xf32>
      %cst_40 = arith.constant dense<0.000000e+00> : vector<1xf32>
      %80 = vector.multi_reduction <add>, %79, %cst_40 [1, 2] : vector<1x1x16xf32> to vector<1xf32>
      %81 = vector.shape_cast %80 : vector<1xf32> to vector<1x1x1xf32>
      %82 = vector.extract %81[0, 0, 0] : f32 from vector<1x1x1xf32>
      %83 = vector.broadcast %82 : f32 to vector<1x1xf32>
      %84 = arith.mulf %56, %56 : vector<1x16xf32>
      %85 = vector.shape_cast %84 : vector<1x16xf32> to vector<1x1x16xf32>
      %cst_41 = arith.constant dense<0.000000e+00> : vector<1xf32>
      %86 = vector.multi_reduction <add>, %85, %cst_41 [1, 2] : vector<1x1x16xf32> to vector<1xf32>
      %87 = vector.shape_cast %86 : vector<1xf32> to vector<1x1x1xf32>
      %88 = vector.extract %87[0, 0, 0] : f32 from vector<1x1x1xf32>
      %89 = vector.broadcast %88 : f32 to vector<1x1xf32>
      %cst_42 = arith.constant 5.000000e-01 : f32
      %90 = vector.broadcast %cst_42 : f32 to vector<1x1xf32>
      %91 = arith.mulf %90, %77 : vector<1x1xf32>
      %cst_43 = arith.constant -14.7030163 : f32
      %92 = vector.broadcast %cst_43 : f32 to vector<1x1xf32>
      %93 = arith.subf %92, %91 : vector<1x1xf32>
      %cst_44 = arith.constant -14.7030163 : f32
      %94 = vector.broadcast %cst_44 : f32 to vector<1x1xf32>
      %95 = arith.subf %94, %83 : vector<1x1xf32>
      %cst_45 = arith.constant 5.000000e-01 : f32
      %96 = vector.broadcast %cst_45 : f32 to vector<1x1xf32>
      %97 = arith.mulf %96, %89 : vector<1x1xf32>
      %98 = arith.subf %95, %97 : vector<1x1xf32>
      %99 = vector.shape_cast %93 : vector<1x1xf32> to vector<1x1xf32>
      %100 = vector.broadcast %99 : vector<1x1xf32> to vector<8x128xf32>
      %c0_46 = arith.constant 0 : index
      %c0_47 = arith.constant 0 : index
      %101 = vector.load %arg10[%c0_46, %c0_47] : memref<8x128xf32, #tpu.memory_space<vmem>>, vector<8x128xf32>
      tpu.vector_store %arg10[%c0_46, %c0_47], %100 {strides = array<i32>} : memref<8x128xf32, #tpu.memory_space<vmem>>, vector<8x128xf32>,
      %102 = vector.shape_cast %98 : vector<1x1xf32> to vector<1x1xf32>
      %103 = vector.broadcast %102 : vector<1x1xf32> to vector<8x128xf32>
      %c0_48 = arith.constant 0 : index
      %c0_49 = arith.constant 0 : index
      %104 = vector.load %arg11[%c0_48, %c0_49] : memref<8x128xf32, #tpu.memory_space<vmem>>, vector<8x128xf32>
      tpu.vector_store %arg11[%c0_48, %c0_49], %103 {strides = array<i32>} : memref<8x128xf32, #tpu.memory_space<vmem>>, vector<8x128xf32>,
    } else {
    }
    %c0_14 = arith.constant 0 : index
    %c0_15 = arith.constant 0 : index
    %43 = vector.load %arg9[%c0_14, %c0_15] : memref<8x16xf32, #tpu.memory_space<vmem>>, vector<8x16xf32>
    %c0_16 = arith.constant 0 : index
    %c0_17 = arith.constant 0 : index
    %44 = vector.load %arg2[%c0_16, %c0_17] : memref<8x32xf32, #tpu.memory_space<vmem>>, vector<8x32xf32>
    %cst_18 = arith.constant dense<0.000000e+00> : vector<8x16xf32>
    %45 = tpu.matmul %44, %12, %cst_18 {dimension_numbers = #tpu.dot_dimension_numbers<[1], [1], [0], [0], [0, 0, 1, 0], [], []>} : vector<8x32xf32>, vector<16x32xf32>, vector<8x16xf32> -> vector<8x16xf32>
    %46 = arith.addf %43, %45 : vector<8x16xf32>
    %c0_19 = arith.constant 0 : index
    %c0_20 = arith.constant 0 : index
    %47 = vector.load %arg9[%c0_19, %c0_20] : memref<8x16xf32, #tpu.memory_space<vmem>>, vector<8x16xf32>
    tpu.vector_store %arg9[%c0_19, %c0_20], %46 {strides = array<i32>} : memref<8x16xf32, #tpu.memory_space<vmem>>, vector<8x16xf32>,
    %c0_21 = arith.constant 0 : index
    %c0_22 = arith.constant 0 : index
    %48 = vector.load %arg10[%c0_21, %c0_22] : memref<8x128xf32, #tpu.memory_space<vmem>>, vector<8x128xf32>
    %49 = vector.broadcast %34 : vector<1x1xf32> to vector<8x128xf32>
    %50 = arith.addf %48, %49 : vector<8x128xf32>
    %c0_23 = arith.constant 0 : index
    %c0_24 = arith.constant 0 : index
    %51 = vector.load %arg10[%c0_23, %c0_24] : memref<8x128xf32, #tpu.memory_space<vmem>>, vector<8x128xf32>
    tpu.vector_store %arg10[%c0_23, %c0_24], %50 {strides = array<i32>} : memref<8x128xf32, #tpu.memory_space<vmem>>, vector<8x128xf32>,
    %c0_25 = arith.constant 0 : index
    %c0_26 = arith.constant 0 : index
    %52 = vector.load %arg11[%c0_25, %c0_26] : memref<8x128xf32, #tpu.memory_space<vmem>>, vector<8x128xf32>
    %53 = vector.broadcast %39 : vector<1x1xf32> to vector<8x128xf32>
    %54 = arith.addf %52, %53 : vector<8x128xf32>
    %c0_27 = arith.constant 0 : index
    %c0_28 = arith.constant 0 : index
    %55 = vector.load %arg11[%c0_27, %c0_28] : memref<8x128xf32, #tpu.memory_space<vmem>>, vector<8x128xf32>
    tpu.vector_store %arg11[%c0_27, %c0_28], %54 {strides = array<i32>} : memref<8x128xf32, #tpu.memory_space<vmem>>, vector<8x128xf32>,
    return
  }
  func.func @transform_0(%arg0: i32, %arg1: i32) -> (i32, i32) {
    %c0_i32 = arith.constant 0 : i32
    %c0_i32_0 = arith.constant 0 : i32
    return %c0_i32, %arg1 : i32, i32
  }
  func.func @transform_1(%arg0: i32, %arg1: i32) -> (i32, i32) {
    %c0_i32 = arith.constant 0 : i32
    return %arg0, %arg1 : i32, i32
  }
  func.func @transform_2(%arg0: i32, %arg1: i32) -> (i32, i32) {
    %c0_i32 = arith.constant 0 : i32
    return %arg0, %arg1 : i32, i32
  }
  func.func @transform_3(%arg0: i32, %arg1: i32) -> (i32, i32) {
    %c0_i32 = arith.constant 0 : i32
    return %arg0, %arg1 : i32, i32
  }
  func.func @transform_4(%arg0: i32, %arg1: i32) -> (i32, i32) {
    %c0_i32 = arith.constant 0 : i32
    %c0_i32_0 = arith.constant 0 : i32
    return %c0_i32, %arg0 : i32, i32
  }
  func.func @transform_5(%arg0: i32, %arg1: i32) -> (i32, i32) {
    %c0_i32 = arith.constant 0 : i32
    %c0_i32_0 = arith.constant 0 : i32
    return %c0_i32, %arg0 : i32, i32
  }
  func.func @transform_6(%arg0: i32, %arg1: i32) -> (i32, i32) {
    %c0_i32 = arith.constant 0 : i32
    %c0_i32_0 = arith.constant 0 : i32
    return %c0_i32, %arg0 : i32, i32
  }
  func.func @transform_7(%arg0: i32, %arg1: i32) -> (i32, i32) {
    %c0_i32 = arith.constant 0 : i32
    %c0_i32_0 = arith.constant 0 : i32
    return %c0_i32, %arg0 : i32, i32
  }
  func.func @transform_8(%arg0: i32, %arg1: i32) -> (i32, i32) {
    %c0_i32 = arith.constant 0 : i32
    %c0_i32_0 = arith.constant 0 : i32
    return %arg0, %c0_i32 : i32, i32
  }
  func.func @transform_9(%arg0: i32, %arg1: i32) -> (i32, i32) {
    %c0_i32 = arith.constant 0 : i32
    %c0_i32_0 = arith.constant 0 : i32
    return %arg0, %c0_i32 : i32, i32
  }
}

</mosaic_0001>

<llo_original>
// kernel: tpu_custom_call.1
$region0: #{tpu_custom_call.1}
  #allocation0 [shape = 'u32[]', space=smem, size = 0x4, offset = 0x4, fixed_abs, tag = 'smem constant byte address 0x4 - core index']
  #allocation1 [shape = 'u32[144,128]{1,0:T(1,128)}', space=vmem, size = 0x12000, scoped, tag = 'internal scratch']
  %s0 = inlined_call_operand.hbm [shape: f32[8,32], index: 0, kind: input, shape index: {}]
  %s1 = inlined_call_operand.hbm [shape: f32[16,32], index: 1, kind: input, shape index: {}]
  %s2 = inlined_call_operand.hbm [shape: f32[16,32], index: 2, kind: input, shape index: {}]
  %s3 = inlined_call_operand.hbm [shape: f32[16,32], index: 3, kind: input, shape index: {}]
  %s4 = inlined_call_operand.vmem [shape: f32[1,16], index: 4, kind: input, shape index: {}]
  %s5 = inlined_call_operand.vmem [shape: f32[1,16], index: 5, kind: input, shape index: {}]
  %s6 = inlined_call_operand.vmem [shape: f32[1,16], index: 6, kind: input, shape index: {}]
  %s7 = inlined_call_operand.hbm [shape: f32[8,16], index: 7, kind: output, shape index: {0}]
  %s8 = inlined_call_operand.hbm [shape: f32[8,128], index: 8, kind: output, shape index: {1}]
  %s9 = inlined_call_operand.hbm [shape: f32[8,128], index: 9, kind: output, shape index: {2}]
  %10 = xla_tuple %s7, %s8, %s9
  %s11 = sld [smem:[#allocation0]]
  $region74: #{tpu_custom_call.1} parent=0
    _
  %s13 = ssub.s32 1, %s11
  %s14 = scalar_select 0, %s13, %s11
  $region1: #{tpu_custom_call.1} parent=0
    #allocation2 [shape = 'u8[4096]{0}', space=vmem, size = 0x1000, scoped, tag = 'input window, operand 0, single buffered']
    #allocation3 [shape = 's32[1]{0}', space=sflag, size = 0x4, scoped, tag = 'scoped memory for tpu_custom_call.1']
    #allocation4 [shape = 's32[1]{0}', space=sflag, size = 0x4, scoped, tag = 'scoped memory for tpu_custom_call.1']
    #allocation5 [shape = 'u8[8192]{0}', space=vmem, size = 0x2000, scoped, tag = 'input window, operand 1, single buffered']
    #allocation6 [shape = 's32[1]{0}', space=sflag, size = 0x4, scoped, tag = 'scoped memory for tpu_custom_call.1']
    #allocation7 [shape = 'u8[8192]{0}', space=vmem, size = 0x2000, scoped, tag = 'input window, operand 2, single buffered']
    #allocation8 [shape = 'u8[8192]{0}', space=vmem, size = 0x2000, scoped, tag = 'input window, operand 3, single buffered']
    #allocation9 [shape = 's32[1]{0}', space=sflag, size = 0x4, scoped, tag = 'scoped memory for tpu_custom_call.1']
    #allocation10 [shape = 'u8[4096]{0}', space=vmem, size = 0x1000, scoped, tag = 'output window, operand 0, single buffered']
    #allocation11 [shape = 'u8[4096]{0}', space=vmem, size = 0x1000, scoped, tag = 'output window, operand 1, single buffered']
    #allocation12 [shape = 's32[1]{0}', space=sflag, size = 0x4, scoped, tag = 'scoped memory for tpu_custom_call.1']
    #allocation13 [shape = 'u8[4096]{0}', space=vmem, size = 0x1000, scoped, tag = 'output window, operand 2, single buffered']
    %15 = vsyncpa [#allocation3], 0
    %16 = vsyncpa [#allocation6], 0
    %17 = vsyncpa [#allocation9], 0
    %18 = vsyncpa [#allocation4], 0
    %19 = vsyncpa [#allocation12], 0
    // Predicated region
    $region2: #{tpu_custom_call.1} parent=1 // pred_check
      _
    $region3: #{tpu_custom_call.1} parent=1 // pred_check_branch
      %21 = sbr.rel (0) target = $region5
    $region4: #{tpu_custom_call.1} parent=1 // pred_region
      %s23 = ssub.s32 128, 128
      %24 = vsyncadd [#allocation3], %s23
      %s26 = sshll.u32 [#allocation2], 4
      %s27 = int_to_ptr.vmem [resolvable:$true] %s26
      %29 = dma.hbm_to_vmem [thread:$0]  %s0, 128, %s27, [#allocation3]
    $region5: #{tpu_custom_call.1} parent=1 // pred_fallthru
      _
    // Predicated region
    $region6: #{tpu_custom_call.1} parent=1 // pred_check
      _
    $region7: #{tpu_custom_call.1} parent=1 // pred_check_branch
      %31 = sbr.rel (0) target = $region9
    $region8: #{tpu_custom_call.1} parent=1 // pred_region
      %s33 = ssub.s32 256, 256
      %34 = vsyncadd [#allocation6], %s33
      %s35 = sshll.u32 [#allocation5], 4
      %s36 = int_to_ptr.vmem [resolvable:$true] %s35
      %41 = dma.hbm_to_vmem [thread:$0]  %s1, 256, %s36, [#allocation6], 128, 128, 8
    $region9: #{tpu_custom_call.1} parent=1 // pred_fallthru
      _
    // Predicated region
    $region10: #{tpu_custom_call.1} parent=1 // pred_check
      _
    $region11: #{tpu_custom_call.1} parent=1 // pred_check_branch
      %43 = sbr.rel (0) target = $region13
    $region12: #{tpu_custom_call.1} parent=1 // pred_region
      %s45 = ssub.s32 256, 256
      %46 = vsyncadd [#allocation6], %s45
      %s47 = sshll.u32 [#allocation7], 4
      %s48 = int_to_ptr.vmem [resolvable:$true] %s47
      %53 = dma.hbm_to_vmem [thread:$0]  %s2, 256, %s48, [#allocation6], 128, 128, 8
    $region13: #{tpu_custom_call.1} parent=1 // pred_fallthru
      _
    // Predicated region
    $region14: #{tpu_custom_call.1} parent=1 // pred_check
      _
    $region15: #{tpu_custom_call.1} parent=1 // pred_check_branch
      %55 = sbr.rel (0) target = $region17
    $region16: #{tpu_custom_call.1} parent=1 // pred_region
      %s57 = ssub.s32 256, 256
      %58 = vsyncadd [#allocation9], %s57
      %s59 = sshll.u32 [#allocation8], 4
      %s60 = int_to_ptr.vmem [resolvable:$true] %s59
      %65 = dma.hbm_to_vmem [thread:$0]  %s3, 256, %s60, [#allocation9], 128, 128, 8
    $region17: #{tpu_custom_call.1} parent=1 // pred_fallthru
      _
    // Predicated region
    $region18: #{tpu_custom_call.1} parent=1 // pred_check
      _
    $region19: #{tpu_custom_call.1} parent=1 // pred_check_branch
      %67 = sbr.rel (0) target = $region21
    $region20: #{tpu_custom_call.1} parent=1 // pred_region
      _
    $region21: #{tpu_custom_call.1} parent=1 // pred_fallthru
      _
    // Predicated region
    $region22: #{tpu_custom_call.1} parent=1 // pred_check
      _
    $region23: #{tpu_custom_call.1} parent=1 // pred_check_branch
      %69 = sbr.rel (0) target = $region25
    $region24: #{tpu_custom_call.1} parent=1 // pred_region
      _
    $region25: #{tpu_custom_call.1} parent=1 // pred_fallthru
      _
    // Predicated region
    $region26: #{tpu_custom_call.1} parent=1 // pred_check
      _
    $region27: #{tpu_custom_call.1} parent=1 // pred_check_branch
      %71 = sbr.rel (0) target = $region29
    $region28: #{tpu_custom_call.1} parent=1 // pred_region
      _
    $region29: #{tpu_custom_call.1} parent=1 // pred_fallthru
      _
    // Predicated region
    $region30: #{tpu_custom_call.1} parent=1 // pred_check
      _
    $region31: #{tpu_custom_call.1} parent=1 // pred_check_branch
      %73 = sbr.rel (0) target = $region33
    $region32: #{tpu_custom_call.1} parent=1 // pred_region
      %74 = dma.done [#allocation3], 128
    $region33: #{tpu_custom_call.1} parent=1 // pred_fallthru
      _
    // Predicated region
    $region34: #{tpu_custom_call.1} parent=1 // pred_check
      _
    $region35: #{tpu_custom_call.1} parent=1 // pred_check_branch
      %76 = sbr.rel (0) target = $region37
    $region36: #{tpu_custom_call.1} parent=1 // pred_region
      %77 = dma.done [#allocation6], 256
    $region37: #{tpu_custom_call.1} parent=1 // pred_fallthru
      _
    // Predicated region
    $region38: #{tpu_custom_call.1} parent=1 // pred_check
      _
    $region39: #{tpu_custom_call.1} parent=1 // pred_check_branch
      %79 = sbr.rel (0) target = $region41
    $region40: #{tpu_custom_call.1} parent=1 // pred_region
      %80 = dma.done [#allocation6], 256
    $region41: #{tpu_custom_call.1} parent=1 // pred_fallthru
      _
    // Predicated region
    $region42: #{tpu_custom_call.1} parent=1 // pred_check
      _
    $region43: #{tpu_custom_call.1} parent=1 // pred_check_branch
      %82 = sbr.rel (0) target = $region45
    $region44: #{tpu_custom_call.1} parent=1 // pred_region
      %83 = dma.done [#allocation9], 256
    $region45: #{tpu_custom_call.1} parent=1 // pred_fallthru
      _
    %v84 = vld [vmem:[#allocation8] sm:$0xff]
    %v85 = vld [vmem:[#allocation8 + $0x8] sm:$0xff]
    %v86 = vld [vmem:[#allocation7] sm:$0xff]
    %v87 = vld [vmem:[#allocation7 + $0x8] sm:$0xff]
    %v88 = vmax.f32 %v86, 0.0
    %v89 = vmax.f32 %v87, 0.0
    %v90 = vand.u32 2147483647, %v86
    %v91 = vand.u32 2147483647, %v87
    %v92 = vsub.f32 0.0, %v90
    %v93 = vsub.f32 0.0, %v91
    %v94 = vmul.f32 %v92, 1.442695
    %v95 = vpow.pop %v94
    %v96 = vmul.f32 %v93, 1.442695
    %v97 = vpow.pop %v96
    %v98 = vadd.f32 %v95, 1.0
    %v99 = vlog2.pop %v98
    %v100 = vmul.f32 %v99, 0.6931472
    %v101 = vmul.f32 -0.5, %v95
    %v102 = vadd.f32 %v101, 1.0
    %v103 = vmul.f32 %v102, %v95
    %v104 = vand.u32 2147483647, %v95
    %vm105 = vcmp.lt.f32.partialorder %v104, 0.0004427343
    %v106 = vsel %vm105, %v103, %v100
    %v107 = vadd.f32 %v97, 1.0
    %v108 = vlog2.pop %v107
    %v109 = vmul.f32 %v108, 0.6931472
    %v110 = vmul.f32 -0.5, %v97
    %v111 = vadd.f32 %v110, 1.0
    %v112 = vmul.f32 %v111, %v97
    %v113 = vand.u32 2147483647, %v97
    %vm114 = vcmp.lt.f32.partialorder %v113, 0.0004427343
    %v115 = vsel %vm114, %v112, %v109
    %v116 = vadd.f32 %v88, %v106
    %v117 = vadd.f32 %v89, %v115
    %v118 = vld [vmem:[#allocation5] sm:$0xff]
    %v119 = vld [vmem:[#allocation5 + $0x8] sm:$0xff]
    %v120 = vmul.f32 %v116, %v84
    %v121 = vmul.f32 %v117, %v85
    %v122 = vadd.f32 %v118, %v120
    %v123 = vadd.f32 %v119, %v121
    %v124 = vmul.f32 %v122, %v122
    %v125 = vmul.f32 %v123, %v123
    %vm126 = vcmask 261120
    %v127 = vsel %vm126, %v124, 0.0
    %v128 = vsel %vm126, %v125, 0.0
    %v129 = vadd.f32 %v127, %v128
    %130 = vadd.xlane.f32.xlu0 %v129
    %v131 = vpop.xlane.xlu0 %130
    %v132 = vrot.slane %v131, 4
    %v133 = vadd.f32 %v131, %v132
    %v134 = vrot.slane %v133, 2
    %v135 = vadd.f32 %v133, %v134
    %v136 = vrot.slane %v135, 1
    %v137 = vadd.f32 %v135, %v136
    %s138 = vtos %v137
    %v139 = vstv %s138
    %v140 = vlog2.pop %v116
    %v141 = vmul.f32 %v140, 0.6931472
    %v142 = vlog2.pop %v117
    %v143 = vmul.f32 %v142, 0.6931472
    %v144 = vsel %vm126, %v141, 0.0
    %v145 = vsel %vm126, %v143, 0.0
    %v146 = vadd.f32 %v144, %v145
    %147 = vadd.xlane.f32.xlu0 %v146
    %v148 = vpop.xlane.xlu0 %147
    %v149 = vrot.slane %v148, 4
    %v150 = vadd.f32 %v148, %v149
    %v151 = vrot.slane %v150, 2
    %v152 = vadd.f32 %v150, %v151
    %v153 = vrot.slane %v152, 1
    %v154 = vadd.f32 %v152, %v153
    %s155 = vtos %v154
    %v156 = vstv %s155
    %v157 = vmul.f32 %v84, %v84
    %v158 = vmul.f32 %v85, %v85
    %v159 = vsel %vm126, %v157, 0.0
    %v160 = vsel %vm126, %v158, 0.0
    %v161 = vadd.f32 %v159, %v160
    %162 = vadd.xlane.f32.xlu0 %v161
    %v163 = vpop.xlane.xlu0 %162
    %v164 = vrot.slane %v163, 4
    %v165 = vadd.f32 %v163, %v164
    %v166 = vrot.slane %v165, 2
    %v167 = vadd.f32 %v165, %v166
    %v168 = vrot.slane %v167, 1
    %v169 = vadd.f32 %v167, %v168
    %s170 = vtos %v169
    %v171 = vstv %s170
    %v172 = vmul.f32 %v139, 0.5
    %v173 = vsub.f32 -470.49652, %v172
    %v174 = vsub.f32 -470.49652, %v156
    %v175 = vmul.f32 %v171, 0.5
    %v176 = vsub.f32 %v174, %v175
    %p177 = scmp.eq.s32.totalorder 0, 0
    // Predicated region
    $region46: #{tpu_custom_call.1} parent=1 // pred_check
      %p178 = pneg %p177
    $region47: #{tpu_custom_call.1} parent=1 // pred_check_branch
      %180 = sbr.rel (%p178) target = $region49
    $region48: #{tpu_custom_call.1} parent=1 // pred_region
      %v181 = vld [vmem:[%s6] sm:$0x1]
      %v182 = vld [vmem:[%s5] sm:$0x1]
      %v183 = vmax.f32 %v182, 0.0
      %v184 = vand.u32 2147483647, %v182
      %v185 = vsub.f32 0.0, %v184
      %v186 = vmul.f32 %v185, 1.442695
      %v187 = vpow.pop %v186
      %v188 = vadd.f32 %v187, 1.0
      %v189 = vlog2.pop %v188
      %v190 = vmul.f32 %v189, 0.6931472
      %v191 = vmul.f32 -0.5, %v187
      %v192 = vadd.f32 %v191, 1.0
      %v193 = vmul.f32 %v192, %v187
      %v194 = vand.u32 2147483647, %v187
      %vm195 = vcmp.lt.f32.partialorder %v194, 0.0004427343
      %v196 = vsel %vm195, %v193, %v190
      %v197 = vadd.f32 %v183, %v196
      %v198 = vld [vmem:[%s4] sm:$0x1]
      %v199 = vmul.f32 %v197, %v181
      %v200 = vadd.f32 %v198, %v199
      %v202 = vlaneseq
      %v203 = vshrl.u32 %v202, 7
      %v204 = vsub.s32 0, %v203
      %v205 = vrot.slane %v200, %v204
      %vm207 = vcmask 130048
      %208 = vst.msk [vmem:[#allocation10] sm:$0xff] %vm207, %v205
      %v209 = vmul.f32 %v200, %v200
      %vm210 = vcmask 122880
      %v211 = vsel %vm210, %v209, 0.0
      %212 = vadd.xlane.f32.xlu0 %v211
      %v213 = vpop.xlane.xlu0 %212
      %v214 = vrot.slane %v213, 4
      %v215 = vadd.f32 %v213, %v214
      %v216 = vrot.slane %v215, 2
      %v217 = vadd.f32 %v215, %v216
      %v218 = vrot.slane %v217, 1
      %v219 = vadd.f32 %v217, %v218
      %s220 = vtos %v219
      %v221 = vstv %s220
      %v222 = vlog2.pop %v197
      %v223 = vmul.f32 %v222, 0.6931472
      %v224 = vsel %vm210, %v223, 0.0
      %225 = vadd.xlane.f32.xlu0 %v224
      %v226 = vpop.xlane.xlu0 %225
      %v227 = vrot.slane %v226, 4
      %v228 = vadd.f32 %v226, %v227
      %v229 = vrot.slane %v228, 2
      %v230 = vadd.f32 %v228, %v229
      %v231 = vrot.slane %v230, 1
      %v232 = vadd.f32 %v230, %v231
      %s233 = vtos %v232
      %v234 = vstv %s233
      %v235 = vmul.f32 %v181, %v181
      %v236 = vsel %vm210, %v235, 0.0
      %237 = vadd.xlane.f32.xlu0 %v236
      %v238 = vpop.xlane.xlu0 %237
      %v239 = vrot.slane %v238, 4
      %v240 = vadd.f32 %v238, %v239
      %v241 = vrot.slane %v240, 2
      %v242 = vadd.f32 %v240, %v241
      %v243 = vrot.slane %v242, 1
      %v244 = vadd.f32 %v242, %v243
      %s245 = vtos %v244
      %v246 = vstv %s245
      %v247 = vmul.f32 %v221, 0.5
      %v248 = vsub.f32 -14.703016, %v247
      %v249 = vsub.f32 -14.703016, %v234
      %v250 = vmul.f32 %v246, 0.5
      %v251 = vsub.f32 %v249, %v250
      %252 = vst [vmem:[#allocation11] sm:$0xff] %v248
      %253 = vst [vmem:[#allocation13] sm:$0xff] %v251
    $region49: #{tpu_custom_call.1} parent=1 // pred_fallthru
      _
    %v254 = vld [vmem:[#allocation10] sm:$0xff]
    %v255 = vld [vmem:[#allocation2] sm:$0xff]
    %v257 = vsel %vm126, %v255, 0
    %v260 = vsel %vm126, %v122, 0
    %v263 = vsel %vm126, %v123, 0
    %265 = vmatprep.subr.mxu0 0.0
    %266 = vmatpush1.xpose.msra.mxu0 %v260
    %267 = vmatprep.subr.mxu0 0.0
    %268 = vmatpush1.xpose.msra.mxu0 %v263
    %269 = vmatprep.subr.mxu0 0.0
    %270 = vmatpush1.xpose.msra.mxu0 0.0
    %271 = vmatprep.subr.mxu0 0.0
    %272 = vmatpush1.xpose.msra.mxu0 0.0
    %273 = vmatprep.subr.mxu0 0.0
    %274 = vmatpush1.xpose.msra.mxu0 0.0
    %275 = vmatprep.subr.mxu0 0.0
    %276 = vmatpush1.xpose.msra.mxu0 0.0
    %277 = vmatprep.subr.mxu0 0.0
    %278 = vmatpush1.xpose.msra.mxu0 0.0
    %279 = vmatprep.subr.mxu0 0.0
    %280 = vmatpush1.xpose.msra.mxu0 0.0
    %281 = vmatprep.subr.mxu0 0.0
    %282 = vmatpush1.xpose.msra.mxu0 0.0
    %283 = vmatprep.subr.mxu0 0.0
    %284 = vmatpush1.xpose.msra.mxu0 0.0
    %285 = vmatprep.subr.mxu0 0.0
    %286 = vmatpush1.xpose.msra.mxu0 0.0
    %287 = vmatprep.subr.mxu0 0.0
    %288 = vmatpush1.xpose.msra.mxu0 0.0
    %289 = vmatprep.subr.mxu0 0.0
    %290 = vmatpush1.xpose.msra.mxu0 0.0
    %291 = vmatprep.subr.mxu0 0.0
    %292 = vmatpush1.xpose.msra.mxu0 0.0
    %293 = vmatprep.subr.mxu0 0.0
    %294 = vmatpush1.xpose.msra.mxu0 0.0
    %295 = vmatprep.subr.mxu0 0.0
    %296 = vmatpush1.xpose.msra.mxu0 0.0
    %297 = vmatprep.subr.mxu0 0.0
    %298 = vmatpush1.xpose.msra.mxu0 0.0
    %299 = vmatprep.subr.mxu0 0.0
    %300 = vmatpush1.xpose.msra.mxu0 0.0
    %301 = vmatprep.subr.mxu0 0.0
    %302 = vmatpush1.xpose.msra.mxu0 0.0
    %303 = vmatprep.subr.mxu0 0.0
    %304 = vmatpush1.xpose.msra.mxu0 0.0
    %305 = vmatprep.subr.mxu0 0.0
    %306 = vmatpush1.xpose.msra.mxu0 0.0
    %307 = vmatprep.subr.mxu0 0.0
    %308 = vmatpush1.xpose.msra.mxu0 0.0
    %309 = vmatprep.subr.mxu0 0.0
    %310 = vmatpush1.xpose.msra.mxu0 0.0
    %311 = vmatprep.subr.mxu0 0.0
    %312 = vmatpush1.xpose.msra.mxu0 0.0
    %313 = vmatprep.subr.mxu0 0.0
    %314 = vmatpush1.xpose.msra.mxu0 0.0
    %315 = vmatprep.subr.mxu0 0.0
    %316 = vmatpush1.xpose.msra.mxu0 0.0
    %317 = vmatprep.subr.mxu0 0.0
    %318 = vmatpush1.xpose.msra.mxu0 0.0
    %319 = vmatprep.subr.mxu0 0.0
    %320 = vmatpush1.xpose.msra.mxu0 0.0
    %321 = vmatprep.subr.mxu0 0.0
    %322 = vmatpush1.xpose.msra.mxu0 0.0
    %323 = vmatprep.subr.mxu0 0.0
    %324 = vmatpush1.xpose.msra.mxu0 0.0
    %325 = vmatprep.subr.mxu0 0.0
    %326 = vmatpush1.xpose.msra.mxu0 0.0
    %327 = vmatprep.subr.mxu0 0.0
    %328 = vmatpush1.xpose.msra.mxu0 0.0
    %329 = vmatprep.mubr.f32.mxu0 0.0
    %330 = vmatmul.mubr.f32.gmra.mrb[0].mxu0 %v257
    %v331 = vpop.f32.mrb[0].mxu0
    %v332 = vadd.f32 0.0, %v331
    %v333 = vpop.f32.mrb[0].mxu0
    %334 = vdwg.mxu0
    %v335 = vadd.f32 %v254, %v332
    %vm336 = vcmask 130048
    %337 = vst.msk [vmem:[#allocation10] sm:$0xff] %vm336, %v335
    %v338 = vld [vmem:[#allocation11] sm:$0xff]
    %v339 = vadd.f32 %v338, %v173
    %340 = vst [vmem:[#allocation11] sm:$0xff] %v339
    %v341 = vld [vmem:[#allocation13] sm:$0xff]
    %v342 = vadd.f32 %v341, %v176
    %343 = vst [vmem:[#allocation13] sm:$0xff] %v342
    // Predicated region
    $region50: #{tpu_custom_call.1} parent=1 // pred_check
      _
    $region51: #{tpu_custom_call.1} parent=1 // pred_check_branch
      %345 = sbr.rel (0) target = $region53
    $region52: #{tpu_custom_call.1} parent=1 // pred_region
      %s347 = ssub.s32 128, 128
      %348 = vsyncadd [#allocation4], %s347
      %s350 = sshll.u32 [#allocation10], 4
      %s351 = int_to_ptr.vmem [resolvable:$true] %s350
      %353 = dma.vmem_to_hbm [thread:$0]  %s351, 128, %s7, [#allocation4]
    $region53: #{tpu_custom_call.1} parent=1 // pred_fallthru
      _
    // Predicated region
    $region54: #{tpu_custom_call.1} parent=1 // pred_check
      _
    $region55: #{tpu_custom_call.1} parent=1 // pred_check_branch
      %355 = sbr.rel (0) target = $region57
    $region56: #{tpu_custom_call.1} parent=1 // pred_region
      %s357 = ssub.s32 128, 128
      %358 = vsyncadd [#allocation12], %s357
      %s360 = sshll.u32 [#allocation11], 4
      %s361 = int_to_ptr.vmem [resolvable:$true] %s360
      %363 = dma.vmem_to_hbm [thread:$0]  %s361, 128, %s8, [#allocation12]
    $region57: #{tpu_custom_call.1} parent=1 // pred_fallthru
      _
    // Predicated region
    $region58: #{tpu_custom_call.1} parent=1 // pred_check
      _
    $region59: #{tpu_custom_call.1} parent=1 // pred_check_branch
      %365 = sbr.rel (0) target = $region61
    $region60: #{tpu_custom_call.1} parent=1 // pred_region
      %s367 = ssub.s32 128, 128
      %368 = vsyncadd [#allocation12], %s367
      %s370 = sshll.u32 [#allocation13], 4
      %s371 = int_to_ptr.vmem [resolvable:$true] %s370
      %373 = dma.vmem_to_hbm [thread:$0]  %s371, 128, %s9, [#allocation12]
    $region61: #{tpu_custom_call.1} parent=1 // pred_fallthru
      _
    // Predicated region
    $region62: #{tpu_custom_call.1} parent=1 // pred_check
      _
    $region63: #{tpu_custom_call.1} parent=1 // pred_check_branch
      %375 = sbr.rel (0) target = $region65
    $region64: #{tpu_custom_call.1} parent=1 // pred_region
      %376 = dma.done [#allocation4], 128
    $region65: #{tpu_custom_call.1} parent=1 // pred_fallthru
      _
    // Predicated region
    $region66: #{tpu_custom_call.1} parent=1 // pred_check
      _
    $region67: #{tpu_custom_call.1} parent=1 // pred_check_branch
      %378 = sbr.rel (0) target = $region69
    $region68: #{tpu_custom_call.1} parent=1 // pred_region
      %379 = dma.done [#allocation12], 128
    $region69: #{tpu_custom_call.1} parent=1 // pred_fallthru
      _
    // Predicated region
    $region70: #{tpu_custom_call.1} parent=1 // pred_check
      _
    $region71: #{tpu_custom_call.1} parent=1 // pred_check_branch
      %381 = sbr.rel (0) target = $region73
    $region72: #{tpu_custom_call.1} parent=1 // pred_region
      %382 = dma.done [#allocation12], 128
    $region73: #{tpu_custom_call.1} parent=1 // pred_fallthru
      _
    %383 = vsyncpa [#allocation3], 1
    %384 = vsyncpa [#allocation6], 1
    %385 = vsyncpa [#allocation9], 1
    %386 = vsyncpa [#allocation4], 1
    %387 = vsyncpa [#allocation12], 1

</llo_original>
